<compile_context>
chip_gen: v7x
topology: tpu7x:2x2x1
jax: 0.10.0
libtpu: 0.0.40
codegen_flags: <defaults>
</compile_context>

<pallas_src>
import jax
import jax.numpy as jnp
from jax import lax
from jax.experimental import pallas as pl
from jax.experimental.pallas import tpu as pltpu  # noqa: F401  (imported per harness contract)

LANES = 128               # lane width / padded feature width used everywhere
VOCAB_DIAG = 831 + 1      # hardcoded in the module
CNN_HIDDEN = 10           # hidden_dim of CNN_embded
CONV_K = 3                # Conv1d kernel_size
BN_EPS = 1e-5


def _round_up(n, m):
    return ((n + m - 1) // m) * m


# ----------------------------- fused Pallas kernel -----------------------------

def _fused_kernel(feat_ref, seqf_ref, w_ref, f_ref, o_ref):
    """Whole forward pass in one kernel (grid=(), whole arrays resident in VMEM).

    feat_ref : [B, 3]   f32  (cat0 + lane_off0, cat1 + lane_off1, raw numerical)
    seqf_ref : [B, KC]  bf16 pre-gathered diagnosis-sequence embeddings, zero-padded
    w_ref    : [KC+512, 128] bf16 weight slab:
                 rows [0,KC)          Conv1d(k=3,pad=1)+Flatten as a banded matmul
                 rows [KC,KC+128)     Layer-1 weights for the one-hot cat lanes (E folded in)
                 rows [KC+128,KC+256) Layer-1 weights for the conv features
                 rows [KC+256,KC+384) Layer-2 weights (BatchNorm1d(H1,eval) folded in)
                 rows [KC+384,KC+512) classifier
    f_ref    : [8, 128] f32  (conv bias | BN-scaled num row | b1 | b2 | a2 | c2 | bcl | 0)
    o_ref    : [B, 128] f32  lane-dense output, real logits in lanes [0, output_size)
    """
    f32 = jnp.float32
    bf16 = jnp.bfloat16
    B = feat_ref.shape[0]
    kc = w_ref.shape[0] - 4 * LANES

    fs = f_ref[...]                         # [8, 128] f32
    bcv = fs[0:1, :]                        # conv bias (o*L + l order)
    w1n = fs[1:2, :]                        # BN(num)-scaled Linear-1 numerical row
    b1 = fs[2:3, :]                         # Linear-1 bias (+ BN(num) shift folded)
    b2 = fs[3:4, :]                         # Linear-2 bias (+ BN1 fold)
    a2 = fs[4:5, :]                         # BatchNorm1d(H2, eval) scale
    c2 = fs[5:6, :]                         # BatchNorm1d(H2, eval) shift
    bcl = fs[6:7, :]                        # classifier bias

    # --- CNN branch: Conv1d(k=3,pad=1) + ReLU + Flatten as one MXU matmul (banded weight) ---
    conv = jnp.dot(seqf_ref[...], w_ref[0:kc, :], preferred_element_type=f32) + bcv
    conv = jnp.maximum(conv, 0.0)           # [B, 128]; padded lanes stay exactly 0

    # --- categorical embeddings as in-kernel one-hot (replaces the XLA gathers) ---
    li = lax.broadcasted_iota(jnp.int32, (B, LANES), 1)
    cat0 = feat_ref[:, 0:1].astype(jnp.int32)        # already shifted to its lane block
    cat1 = feat_ref[:, 1:2].astype(jnp.int32)
    xnum = feat_ref[:, 2:3]                           # raw numerical column (BN folded in w1n/b1)
    onehot = ((li == cat0) | (li == cat1)).astype(bf16)   # [B, 128]

    # --- Layer 1: Linear(9+100 -> H1) + ReLU (embedding tables + BN(num) folded in) ---
    # TODO(synk): on v7x the two dots could share one MRB accumulator (merge into one matmul).
    h = (jnp.dot(onehot, w_ref[kc:kc + LANES, :], preferred_element_type=f32)
         + jnp.dot(conv.astype(bf16), w_ref[kc + LANES:kc + 2 * LANES, :],
                   preferred_element_type=f32)
         + xnum * w1n + b1)
    h = jnp.maximum(h, 0.0)
    # BatchNorm1d(H1, eval) folded into the Layer-2 weights; Dropout == identity at inference.

    # --- Layer 2: Linear(H1 -> H2) + ReLU + BatchNorm1d(H2, eval) ---
    h = jnp.dot(h.astype(bf16), w_ref[kc + 2 * LANES:kc + 3 * LANES, :],
                preferred_element_type=f32) + b2
    h = jnp.maximum(h, 0.0)
    h = h * a2 + c2

    # --- torch.sigmoid(x) * x  (SiLU), then classifier ---
    h = h * jax.nn.sigmoid(h)
    o_ref[...] = jnp.dot(h.astype(bf16), w_ref[kc + 3 * LANES:kc + 4 * LANES, :],
                         preferred_element_type=f32) + bcl


# ----------------------------- parameter construction -----------------------------

def _conv1d_as_matmul_weight(conv_w, L):
    """Fold Conv1d(C->O, k=3, padding=1) + nn.Flatten into one [L*C, O*L] matrix.

    W[lp*C + c, o*L + l] = conv_w[o, c, lp - l + 1]  if 0 <= lp - l + 1 < K else 0
    so   seq_flat[b] @ W  ==  Flatten(Conv1d output in NCL order).
    """
    O, C, K = conv_w.shape
    lp = jnp.arange(L)[:, None]                  # source (input) position
    lo = jnp.arange(L)[None, :]                  # output position
    k = lp - lo + 1                              # tap index
    valid = (k >= 0) & (k < K)
    k_c = jnp.clip(k, 0, K - 1)
    w_kco = jnp.transpose(conv_w, (2, 1, 0))     # [K, C, O]
    Wt = w_kco[k_c] * valid[:, :, None, None]    # [L(lp), L(l), C, O]
    Wt = jnp.transpose(Wt, (0, 2, 3, 1))         # [lp, C, O, l]
    return Wt.reshape(L * C, O * L)


def init_params(key, embedding_size, num_numerical_cols, output_size, layers, seq_len):
    assert len(layers) == 2, "this synthetic init instantiates layers=[h1, h2]"
    assert len(embedding_size) == 2, "the module's forward hardcodes x[:, :2] categoricals"
    assert num_numerical_cols == 1, "the module's forward hardcodes x[:, 2:3] numerical"
    C, L, O = CNN_HIDDEN, seq_len, output_size
    h1, h2 = layers
    n_conv = O * L
    assert n_conv == 100, "model hardcodes `+ 100` CNN features"
    num_cat = sum(nf for _, nf in embedding_size)
    assert sum(ni for ni, _ in embedding_size) <= LANES
    assert n_conv <= LANES and h1 <= LANES and h2 <= LANES and O <= LANES
    kc = _round_up(L * C, LANES)                 # padded conv contraction dim (250 -> 256)

    f32 = jnp.float32
    ks = jax.random.split(key, 8)

    # nn.Embedding default init: N(0, 1)
    cat_emb = [jax.random.normal(ks[i], (ni, nf), f32)
               for i, (ni, nf) in enumerate(embedding_size)]
    seq_emb = jax.random.normal(ks[2], (VOCAB_DIAG, C), f32)

    # BatchNorm1d(num_numerical_cols), PyTorch defaults (eval / running stats)
    g_n = jnp.ones((1,), f32); b_n = jnp.zeros((1,), f32)
    m_n = jnp.zeros((1,), f32); v_n = jnp.ones((1,), f32)
    a_num = (g_n / jnp.sqrt(v_n + BN_EPS))[0]
    c_num = (b_n - m_n * (g_n / jnp.sqrt(v_n + BN_EPS)))[0]

    # Conv1d(CNN_HIDDEN -> output_size, kernel=3, padding=1)
    fan_in = C * CONV_K
    conv_w = jax.random.normal(ks[3], (O, C, CONV_K), f32) / jnp.sqrt(float(fan_in))
    conv_b = 0.01 * jax.random.normal(ks[4], (O,), f32)

    def linear(k, din, dout):
        w = jax.random.normal(k, (din, dout), f32) / jnp.sqrt(float(din))
        return w, jnp.zeros((dout,), f32)

    def bn_eval(dim):
        gamma = jnp.ones((dim,), f32); beta = jnp.zeros((dim,), f32)
        mean = jnp.zeros((dim,), f32); var = jnp.ones((dim,), f32)
        a = gamma / jnp.sqrt(var + BN_EPS)
        return a, beta - mean * a

    f0 = num_cat + num_numerical_cols + n_conv
    w1, b1 = linear(ks[5], f0, h1)
    a1, c1 = bn_eval(h1)
    w2, b2 = linear(ks[6], h1, h2)
    a2, c2 = bn_eval(h2)
    wc, bc = linear(ks[7], h2, O)

    # ---------- bf16 weight slab [kc + 4*128, 128], all padding exactly zero ----------
    wcv = _conv1d_as_matmul_weight(conv_w, L)                             # [L*C, O*L]
    blk_conv = jnp.zeros((kc, LANES), f32).at[:L * C, :n_conv].set(wcv)

    # Layer-1 categorical block: embedding tables folded into the one-hot lanes.
    blk_w1cat = jnp.zeros((LANES, LANES), f32)
    feat_shift = [0.0, 0.0, 0.0]                 # lane offset added to each cat code
    lane_off, col_off = 0, 0
    for t, ((ni, nf), E) in enumerate(zip(embedding_size, cat_emb)):
        folded = E @ w1[col_off:col_off + nf, :]                          # [ni, h1]
        blk_w1cat = blk_w1cat.at[lane_off:lane_off + ni, :h1].set(folded)
        feat_shift[t] = float(lane_off)
        lane_off += ni
        col_off += nf

    w1num = w1[num_cat]                                                   # [h1]
    w1conv = w1[num_cat + 1:]                                             # [O*L, h1]
    blk_w1conv = jnp.zeros((LANES, LANES), f32).at[:n_conv, :h1].set(w1conv)

    # BatchNorm1d(h1) in eval is affine -> fold it into the next Linear.
    w2f = w2 * a1[:, None]
    b2f = b2 + c1 @ w2
    blk_w2 = jnp.zeros((LANES, LANES), f32).at[:h1, :h2].set(w2f)
    blk_wc = jnp.zeros((LANES, LANES), f32).at[:h2, :O].set(wc)

    wslab = jnp.concatenate([blk_conv, blk_w1cat, blk_w1conv, blk_w2, blk_wc],
                            axis=0).astype(jnp.bfloat16)

    # ---------- f32 bias / scale slab [8, 128] ----------
    def row(vec):
        v = jnp.asarray(vec, f32).reshape(-1)
        return jnp.zeros((LANES,), f32).at[:v.shape[0]].set(v)

    fslab = jnp.stack([
        row(jnp.repeat(conv_b, L)),            # 0: conv bias in o*L + l order
        row(a_num * w1num),                    # 1: BN(num)-scaled Linear-1 numerical row
        row(b1 + c_num * w1num),               # 2: Linear-1 bias (+ BN(num) shift folded)
        row(b2f),                              # 3: Linear-2 bias (+ BN1 fold)
        row(a2),                               # 4: BatchNorm1d(H2) scale
        row(c2),                               # 5: BatchNorm1d(H2) shift
        row(bc),                               # 6: classifier bias
        jnp.zeros((LANES,), f32),              # 7: pad to an (8,128) tile
    ], axis=0)

    return {
        "wslab": wslab,
        "fslab": fslab,
        "seq_emb": seq_emb.astype(jnp.bfloat16),
        "feat_shift": jnp.asarray(feat_shift, f32),
    }


# ----------------------------- forward (jitted glue + fused kernel) -----------------------------

def make_forward(output_size):
    @jax.jit
    def forward(x, params):
        x = x.astype(jnp.float32)
        B = x.shape[0]
        # Raw categorical codes (shifted to their one-hot lane blocks) + raw numerical column;
        # the actual embedding lookup / BatchNorm happen inside the kernel.
        feat = x[:, :3] + params["feat_shift"]

        # Diagnosis-sequence embedding gather; row-major flatten matches the banded conv rows.
        # TODO(synk): this gather (+pad) stays in fused XLA glue; an in-kernel gather of the
        # 832x10 table would need either a sublane->lane reshape or a multi-MiB vocab-folded
        # weight, both worse than one fused gather at this size.
        seqs = x[:, 3:].astype(jnp.int32)
        seqf = params["seq_emb"][seqs].reshape(B, -1)                     # [B, L*10] bf16
        kc = params["wslab"].shape[0] - 4 * LANES
        seqf = jnp.pad(seqf, ((0, 0), (0, kc - seqf.shape[1])))           # [B, kc]

        out = pl.pallas_call(
            _fused_kernel,
            out_shape=jax.ShapeDtypeStruct((B, LANES), jnp.float32),
        )(feat, seqf, params["wslab"], params["fslab"])
        return out[:, :output_size]
    return forward


# ----------------------------- main -----------------------------

if __name__ == "__main__":
    B = 2
    embedding_size = [(10, 4), (10, 4)]          # -> num_categorical_cols = 8
    num_numerical_cols = 1
    output_size = 4
    layers = [32, 16]
    seq_len = 25                                 # output_size * seq_len == 100

    key = jax.random.PRNGKey(0)
    kp, kc_, kn, ks = jax.random.split(key, 4)
    params = init_params(kp, embedding_size, num_numerical_cols, output_size, layers, seq_len)
    forward = make_forward(output_size)

    cat = jax.random.randint(kc_, (B, 2), 0, 10)
    num = jax.random.normal(kn, (B, 1), jnp.float32)
    seqs = jax.random.randint(ks, (B, seq_len), 0, VOCAB_DIAG)
    x = jnp.concatenate([cat.astype(jnp.float32), num, seqs.astype(jnp.float32)], axis=1)

    out = forward(x, params)
    out = jax.block_until_ready(out)
    assert out.shape == (B, output_size) and out.dtype == jnp.float32
    assert bool(jnp.all(jnp.isfinite(out)))
    print("KERNEL_OK")
</pallas_src>

<mosaic_0001>
module attributes {stable_mosaic.version = 11 : i64} {
  func.func @_fused_kernel(%arg0: memref<2x3xf32, #tpu.memory_space<vmem>>, %arg1: memref<2x256xbf16, #tpu.memory_space<vmem>>, %arg2: memref<768x128xbf16, #tpu.memory_space<vmem>>, %arg3: memref<8x128xf32, #tpu.memory_space<vmem>>, %arg4: memref<2x128xf32, #tpu.memory_space<vmem>>) attributes {dimension_semantics = [], scalar_prefetch = 0 : i64, scratch_operands = 0 : i64, tpu.core_type = #tpu.core_type<tc>} {
    %c0 = arith.constant 0 : index
    %c0_0 = arith.constant 0 : index
    %0 = vector.load %arg3[%c0, %c0_0] : memref<8x128xf32, #tpu.memory_space<vmem>>, vector<8x128xf32>
    %1 = vector.extract_strided_slice %0 {offsets = [0, 0], sizes = [1, 128], strides = [1, 1]} : vector<8x128xf32> to vector<1x128xf32>
    %2 = vector.extract_strided_slice %0 {offsets = [1, 0], sizes = [1, 128], strides = [1, 1]} : vector<8x128xf32> to vector<1x128xf32>
    %3 = vector.extract_strided_slice %0 {offsets = [2, 0], sizes = [1, 128], strides = [1, 1]} : vector<8x128xf32> to vector<1x128xf32>
    %4 = vector.extract_strided_slice %0 {offsets = [3, 0], sizes = [1, 128], strides = [1, 1]} : vector<8x128xf32> to vector<1x128xf32>
    %5 = vector.extract_strided_slice %0 {offsets = [4, 0], sizes = [1, 128], strides = [1, 1]} : vector<8x128xf32> to vector<1x128xf32>
    %6 = vector.extract_strided_slice %0 {offsets = [5, 0], sizes = [1, 128], strides = [1, 1]} : vector<8x128xf32> to vector<1x128xf32>
    %7 = vector.extract_strided_slice %0 {offsets = [6, 0], sizes = [1, 128], strides = [1, 1]} : vector<8x128xf32> to vector<1x128xf32>
    %c0_1 = arith.constant 0 : index
    %c0_2 = arith.constant 0 : index
    %8 = vector.load %arg1[%c0_1, %c0_2] : memref<2x256xbf16, #tpu.memory_space<vmem>>, vector<2x256xbf16>
    %c0_3 = arith.constant 0 : index
    %c0_4 = arith.constant 0 : index
    %9 = vector.load %arg2[%c0_3, %c0_4] : memref<768x128xbf16, #tpu.memory_space<vmem>>, vector<256x128xbf16>
    %cst = arith.constant dense<0.000000e+00> : vector<2x128xf32>
    %10 = tpu.matmul %8, %9, %cst {dimension_numbers = #tpu.dot_dimension_numbers<[1], [0], [0], [1], [0, 0, 1, 1], [], []>} : vector<2x256xbf16>, vector<256x128xbf16>, vector<2x128xf32> -> vector<2x128xf32>
    %11 = vector.broadcast %1 : vector<1x128xf32> to vector<2x128xf32>
    %12 = arith.addf %10, %11 : vector<2x128xf32>
    %cst_5 = arith.constant 0.000000e+00 : f32
    %13 = vector.broadcast %cst_5 : f32 to vector<2x128xf32>
    %14 = arith.maximumf %12, %13 : vector<2x128xf32>
    %15 = tpu.iota {dimensions = array<i32: 1>} : vector<2x128xi32>
    %c0_6 = arith.constant 0 : index
    %c0_7 = arith.constant 0 : index
    %16 = vector.load %arg0[%c0_6, %c0_7] : memref<2x3xf32, #tpu.memory_space<vmem>>, vector<2x1xf32>
    %17 = arith.fptosi %16 : vector<2x1xf32> to vector<2x1xi32>
    %c0_8 = arith.constant 0 : index
    %c1 = arith.constant 1 : index
    %18 = vector.load %arg0[%c0_8, %c1] : memref<2x3xf32, #tpu.memory_space<vmem>>, vector<2x1xf32>
    %19 = arith.fptosi %18 : vector<2x1xf32> to vector<2x1xi32>
    %c0_9 = arith.constant 0 : index
    %c2 = arith.constant 2 : index
    %20 = vector.load %arg0[%c0_9, %c2] : memref<2x3xf32, #tpu.memory_space<vmem>>, vector<2x1xf32>
    %21 = vector.broadcast %17 : vector<2x1xi32> to vector<2x128xi32>
    %22 = arith.cmpi eq, %15, %21 : vector<2x128xi32>
    %23 = vector.broadcast %19 : vector<2x1xi32> to vector<2x128xi32>
    %24 = arith.cmpi eq, %15, %23 : vector<2x128xi32>
    %25 = arith.ori %22, %24 : vector<2x128xi1>
    %26 = arith.extui %25 : vector<2x128xi1> to vector<2x128xi32>
    %27 = arith.sitofp %26 : vector<2x128xi32> to vector<2x128xf32>
    %28 = arith.truncf %27 : vector<2x128xf32> to vector<2x128xbf16>
    %c256 = arith.constant 256 : index
    %c0_10 = arith.constant 0 : index
    %29 = vector.load %arg2[%c256, %c0_10] : memref<768x128xbf16, #tpu.memory_space<vmem>>, vector<128x128xbf16>
    %cst_11 = arith.constant dense<0.000000e+00> : vector<2x128xf32>
    %30 = tpu.matmul %28, %29, %cst_11 {dimension_numbers = #tpu.dot_dimension_numbers<[1], [0], [0], [1], [0, 0, 1, 1], [], []>} : vector<2x128xbf16>, vector<128x128xbf16>, vector<2x128xf32> -> vector<2x128xf32>
    %31 = arith.truncf %14 : vector<2x128xf32> to vector<2x128xbf16>
    %c384 = arith.constant 384 : index
    %c0_12 = arith.constant 0 : index
    %32 = vector.load %arg2[%c384, %c0_12] : memref<768x128xbf16, #tpu.memory_space<vmem>>, vector<128x128xbf16>
    %cst_13 = arith.constant dense<0.000000e+00> : vector<2x128xf32>
    %33 = tpu.matmul %31, %32, %cst_13 {dimension_numbers = #tpu.dot_dimension_numbers<[1], [0], [0], [1], [0, 0, 1, 1], [], []>} : vector<2x128xbf16>, vector<128x128xbf16>, vector<2x128xf32> -> vector<2x128xf32>
    %34 = arith.addf %30, %33 : vector<2x128xf32>
    %35 = vector.broadcast %20 : vector<2x1xf32> to vector<2x128xf32>
    %36 = vector.broadcast %2 : vector<1x128xf32> to vector<2x128xf32>
    %37 = arith.mulf %35, %36 : vector<2x128xf32>
    %38 = arith.addf %34, %37 : vector<2x128xf32>
    %39 = vector.broadcast %3 : vector<1x128xf32> to vector<2x128xf32>
    %40 = arith.addf %38, %39 : vector<2x128xf32>
    %cst_14 = arith.constant 0.000000e+00 : f32
    %41 = vector.broadcast %cst_14 : f32 to vector<2x128xf32>
    %42 = arith.maximumf %40, %41 : vector<2x128xf32>
    %43 = arith.truncf %42 : vector<2x128xf32> to vector<2x128xbf16>
    %c512 = arith.constant 512 : index
    %c0_15 = arith.constant 0 : index
    %44 = vector.load %arg2[%c512, %c0_15] : memref<768x128xbf16, #tpu.memory_space<vmem>>, vector<128x128xbf16>
    %cst_16 = arith.constant dense<0.000000e+00> : vector<2x128xf32>
    %45 = tpu.matmul %43, %44, %cst_16 {dimension_numbers = #tpu.dot_dimension_numbers<[1], [0], [0], [1], [0, 0, 1, 1], [], []>} : vector<2x128xbf16>, vector<128x128xbf16>, vector<2x128xf32> -> vector<2x128xf32>
    %46 = vector.broadcast %4 : vector<1x128xf32> to vector<2x128xf32>
    %47 = arith.addf %45, %46 : vector<2x128xf32>
    %cst_17 = arith.constant 0.000000e+00 : f32
    %48 = vector.broadcast %cst_17 : f32 to vector<2x128xf32>
    %49 = arith.maximumf %47, %48 : vector<2x128xf32>
    %50 = vector.broadcast %5 : vector<1x128xf32> to vector<2x128xf32>
    %51 = arith.mulf %49, %50 : vector<2x128xf32>
    %52 = vector.broadcast %6 : vector<1x128xf32> to vector<2x128xf32>
    %53 = arith.addf %51, %52 : vector<2x128xf32>
    %54 = arith.negf %53 : vector<2x128xf32>
    %55 = math.exp %54 : vector<2x128xf32>
    %cst_18 = arith.constant 1.000000e+00 : f32
    %56 = vector.broadcast %cst_18 : f32 to vector<2x128xf32>
    %57 = arith.addf %56, %55 : vector<2x128xf32>
    %58 = arith.divf %56, %57 : vector<2x128xf32>
    %59 = arith.mulf %53, %58 : vector<2x128xf32>
    %60 = arith.truncf %59 : vector<2x128xf32> to vector<2x128xbf16>
    %c640 = arith.constant 640 : index
    %c0_19 = arith.constant 0 : index
    %61 = vector.load %arg2[%c640, %c0_19] : memref<768x128xbf16, #tpu.memory_space<vmem>>, vector<128x128xbf16>
    %cst_20 = arith.constant dense<0.000000e+00> : vector<2x128xf32>
    %62 = tpu.matmul %60, %61, %cst_20 {dimension_numbers = #tpu.dot_dimension_numbers<[1], [0], [0], [1], [0, 0, 1, 1], [], []>} : vector<2x128xbf16>, vector<128x128xbf16>, vector<2x128xf32> -> vector<2x128xf32>
    %63 = vector.broadcast %7 : vector<1x128xf32> to vector<2x128xf32>
    %64 = arith.addf %62, %63 : vector<2x128xf32>
    %c0_21 = arith.constant 0 : index
    %c0_22 = arith.constant 0 : index
    %65 = vector.load %arg4[%c0_21, %c0_22] : memref<2x128xf32, #tpu.memory_space<vmem>>, vector<2x128xf32>
    tpu.vector_store %arg4[%c0_21, %c0_22], %64 {strides = array<i32>} : memref<2x128xf32, #tpu.memory_space<vmem>>, vector<2x128xf32>,
    return
  }
}

</mosaic_0001>

<llo_original>
// kernel: forward.1
$region0: #{forward.1}
  #allocation0 [shape = 'u32[]', space=smem, size = 0x4, offset = 0x4, fixed_abs, tag = 'smem constant byte address 0x4 - core index']
  #allocation1 [shape = 'u32[144,128]{1,0:T(1,128)}', space=vmem, size = 0x12000, scoped, tag = 'internal scratch']
  %s0 = inlined_call_operand.vmem [shape: f32[2,3], index: 0, kind: input, shape index: {}]
  %s1 = inlined_call_operand.vmem [shape: bf16[2,256], index: 1, kind: input, shape index: {}]
  %s2 = inlined_call_operand.vmem [shape: bf16[768,128], index: 2, kind: input, shape index: {}]
  %s3 = inlined_call_operand.vmem [shape: f32[8,128], index: 3, kind: input, shape index: {}]
  %s4 = inlined_call_operand.hbm [shape: f32[2,128], index: 4, kind: output, shape index: {}]
  %s5 = sld [smem:[#allocation0]]
  $region26: #{forward.1} parent=0
    _
  %s7 = ssub.s32 1, %s5
  %s8 = scalar_select 0, %s7, %s5
  $region1: #{forward.1} parent=0
    #allocation2 [shape = 'u8[1024]{0}', space=vmem, size = 0x400, scoped, tag = 'output window, operand 0, single buffered']
    #allocation3 [shape = 's32[1]{0}', space=sflag, size = 0x4, scoped, tag = 'scoped memory for forward.1']
    %9 = vsyncpa [#allocation3], 0
    // Predicated region
    $region2: #{forward.1} parent=1 // pred_check
      _
    $region3: #{forward.1} parent=1 // pred_check_branch
      %11 = sbr.rel (0) target = $region5
    $region4: #{forward.1} parent=1 // pred_region
      _
    $region5: #{forward.1} parent=1 // pred_fallthru
      _
    // Predicated region
    $region6: #{forward.1} parent=1 // pred_check
      _
    $region7: #{forward.1} parent=1 // pred_check_branch
      %13 = sbr.rel (0) target = $region9
    $region8: #{forward.1} parent=1 // pred_region
      _
    $region9: #{forward.1} parent=1 // pred_fallthru
      _
    // Predicated region
    $region10: #{forward.1} parent=1 // pred_check
      _
    $region11: #{forward.1} parent=1 // pred_check_branch
      %15 = sbr.rel (0) target = $region13
    $region12: #{forward.1} parent=1 // pred_region
      _
    $region13: #{forward.1} parent=1 // pred_fallthru
      _
    // Predicated region
    $region14: #{forward.1} parent=1 // pred_check
      _
    $region15: #{forward.1} parent=1 // pred_check_branch
      %17 = sbr.rel (0) target = $region17
    $region16: #{forward.1} parent=1 // pred_region
      _
    $region17: #{forward.1} parent=1 // pred_fallthru
      _
    %v19 = vld [vmem:[%s3] sm:$0xff]
    %v20 = vld [vmem:[%s1] sm:$0x3]
    %v21 = vld [vmem:[%s2] sm:$0xf]
    %v22 = vld [vmem:[%s2 + $0x4] sm:$0xf]
    %v23 = vld [vmem:[%s2 + $0x8] sm:$0xf]
    %v24 = vld [vmem:[%s2 + $0xc] sm:$0xf]
    %v25 = vld [vmem:[%s2 + $0x10] sm:$0xf]
    %v26 = vld [vmem:[%s2 + $0x14] sm:$0xf]
    %v27 = vld [vmem:[%s2 + $0x18] sm:$0xf]
    %v28 = vld [vmem:[%s2 + $0x1c] sm:$0xf]
    %v29 = vld [vmem:[%s2 + $0x20] sm:$0xf]
    %v30 = vld [vmem:[%s2 + $0x24] sm:$0xf]
    %v31 = vld [vmem:[%s2 + $0x28] sm:$0xf]
    %v32 = vld [vmem:[%s2 + $0x2c] sm:$0xf]
    %v33 = vld [vmem:[%s2 + $0x30] sm:$0xf]
    %v34 = vld [vmem:[%s2 + $0x34] sm:$0xf]
    %v35 = vld [vmem:[%s2 + $0x38] sm:$0xf]
    %v36 = vld [vmem:[%s2 + $0x3c] sm:$0xf]
    %v37 = vld [vmem:[%s2 + $0x40] sm:$0xf]
    %v38 = vld [vmem:[%s2 + $0x44] sm:$0xf]
    %v39 = vld [vmem:[%s2 + $0x48] sm:$0xf]
    %v40 = vld [vmem:[%s2 + $0x4c] sm:$0xf]
    %v41 = vld [vmem:[%s2 + $0x50] sm:$0xf]
    %v42 = vld [vmem:[%s2 + $0x54] sm:$0xf]
    %v43 = vld [vmem:[%s2 + $0x58] sm:$0xf]
    %v44 = vld [vmem:[%s2 + $0x5c] sm:$0xf]
    %v45 = vld [vmem:[%s2 + $0x60] sm:$0xf]
    %v46 = vld [vmem:[%s2 + $0x64] sm:$0xf]
    %v47 = vld [vmem:[%s2 + $0x68] sm:$0xf]
    %v48 = vld [vmem:[%s2 + $0x6c] sm:$0xf]
    %v49 = vld [vmem:[%s2 + $0x70] sm:$0xf]
    %v50 = vld [vmem:[%s2 + $0x74] sm:$0xf]
    %v51 = vld [vmem:[%s2 + $0x78] sm:$0xf]
    %v52 = vld [vmem:[%s2 + $0x7c] sm:$0xf]
    %v53 = vlaneseq
    %v54 = vshrl.u32 %v53, 7
    %v55 = vsub.s32 0, %v54
    %v56 = vrot.slane %v19, %v55
    %v59 = vunpack.c.l.s4 1966171168
    %v60 = vunpack.c.0.s8 %v59
    %v61 = vlaneseq
    %v62 = vshrl.u32 %v61, 7
    %v63 = vsub.s32 %v60, %v62
    %v64 = vrot.slane %v20, %v63
    %v65 = vcombine.high %v64, %v64
    %v67 = vunpack.c.l.s4 1966171168
    %v68 = vunpack.c.0.s8 %v67
    %v69 = vlaneseq
    %v70 = vshrl.u32 %v69, 7
    %v71 = vsub.s32 %v68, %v70
    %v72 = vrot.slane %v64, %v71
    %v74 = vunpack.c.l.s4 1966171168
    %v75 = vunpack.c.0.s8 %v74
    %v76 = vlaneseq
    %v77 = vshrl.u32 %v76, 7
    %v78 = vsub.s32 %v75, %v77
    %v79 = vrot.slane %v65, %v78
    %v114 = vunpack.c.l.b16 %v21
    %v115 = vunpack.c.l.b16 %v22
    %v116 = vunpack.c.l.b16 %v23
    %v117 = vunpack.c.l.b16 %v24
    %v118 = vunpack.c.l.b16 %v25
    %v119 = vunpack.c.l.b16 %v26
    %v120 = vunpack.c.l.b16 %v27
    %v121 = vunpack.c.l.b16 %v28
    %v122 = vunpack.c.l.b16 %v29
    %v123 = vunpack.c.l.b16 %v30
    %v124 = vunpack.c.l.b16 %v31
    %v125 = vunpack.c.l.b16 %v32
    %v126 = vunpack.c.l.b16 %v33
    %v127 = vunpack.c.l.b16 %v34
    %v128 = vunpack.c.l.b16 %v35
    %v129 = vunpack.c.l.b16 %v36
    %v130 = vunpack.c.l.b16 %v37
    %v131 = vunpack.c.l.b16 %v38
    %v132 = vunpack.c.l.b16 %v39
    %v133 = vunpack.c.l.b16 %v40
    %v134 = vunpack.c.l.b16 %v41
    %v135 = vunpack.c.l.b16 %v42
    %v136 = vunpack.c.l.b16 %v43
    %v137 = vunpack.c.l.b16 %v44
    %v138 = vunpack.c.l.b16 %v45
    %v139 = vunpack.c.l.b16 %v46
    %v140 = vunpack.c.l.b16 %v47
    %v141 = vunpack.c.l.b16 %v48
    %v142 = vunpack.c.l.b16 %v49
    %v143 = vunpack.c.l.b16 %v50
    %v144 = vunpack.c.l.b16 %v51
    %v145 = vunpack.c.l.b16 %v52
    %v146 = vpack.c.b16 %v115, %v114
    %v147 = vpack.c.b16 %v117, %v116
    %v148 = vpack.c.b16 %v119, %v118
    %v149 = vpack.c.b16 %v121, %v120
    %v150 = vpack.c.b16 %v123, %v122
    %v151 = vpack.c.b16 %v125, %v124
    %v152 = vpack.c.b16 %v127, %v126
    %v153 = vpack.c.b16 %v129, %v128
    %v154 = vpack.c.b16 %v131, %v130
    %v155 = vpack.c.b16 %v133, %v132
    %v156 = vpack.c.b16 %v135, %v134
    %v157 = vpack.c.b16 %v137, %v136
    %v158 = vpack.c.b16 %v139, %v138
    %v159 = vpack.c.b16 %v141, %v140
    %v160 = vpack.c.b16 %v143, %v142
    %v161 = vpack.c.b16 %v145, %v144
    %178 = vmatprep.subr.bf16.mxu0 0
    %179 = vmatpush1.bf16.msra.mxu0 %v146
    %180 = vmatprep.subr.bf16.mxu0 0
    %181 = vmatpush1.bf16.msra.mxu0 %v147
    %182 = vmatprep.subr.bf16.mxu0 0
    %183 = vmatpush1.bf16.msra.mxu0 %v148
    %184 = vmatprep.subr.bf16.mxu0 0
    %185 = vmatpush1.bf16.msra.mxu0 %v149
    %186 = vmatprep.subr.bf16.mxu0 0
    %187 = vmatpush1.bf16.msra.mxu0 %v150
    %188 = vmatprep.subr.bf16.mxu0 0
    %189 = vmatpush1.bf16.msra.mxu0 %v151
    %190 = vmatprep.subr.bf16.mxu0 0
    %191 = vmatpush1.bf16.msra.mxu0 %v152
    %192 = vmatprep.subr.bf16.mxu0 0
    %193 = vmatpush1.bf16.msra.mxu0 %v153
    %194 = vmatprep.subr.bf16.mxu0 0
    %195 = vmatpush1.bf16.msra.mxu0 %v154
    %196 = vmatprep.subr.bf16.mxu0 0
    %197 = vmatpush1.bf16.msra.mxu0 %v155
    %198 = vmatprep.subr.bf16.mxu0 0
    %199 = vmatpush1.bf16.msra.mxu0 %v156
    %200 = vmatprep.subr.bf16.mxu0 0
    %201 = vmatpush1.bf16.msra.mxu0 %v157
    %202 = vmatprep.subr.bf16.mxu0 0
    %203 = vmatpush1.bf16.msra.mxu0 %v158
    %204 = vmatprep.subr.bf16.mxu0 0
    %205 = vmatpush1.bf16.msra.mxu0 %v159
    %206 = vmatprep.subr.bf16.mxu0 0
    %207 = vmatpush1.bf16.msra.mxu0 %v160
    %208 = vmatprep.subr.bf16.mxu0 0
    %209 = vmatpush1.bf16.msra.mxu0 %v161
    %210 = vmatprep.mubr.bf16.mxu0 %v79
    %211 = vmatmul.mubr.bf16.gmra.mrb[0].mxu0 %v72
    %v212 = vpop.f32.mrb[0].mxu0
    %v213 = vadd.f32 %v56, %v212
    %v214 = vpop.f32.mrb[0].mxu0
    %v215 = vpop.f32.mrb[0].mxu0
    %v216 = vpop.f32.mrb[0].mxu0
    %217 = vdwg.mxu0
    %v218 = vmax.f32 %v213, 0.0
    %v219 = vlaneseq
    %v220 = vand.u32 %v219, 127
    %v221 = vld [vmem:[%s0] sm:$0x3]
    %v222 = vcvt.f32.s32.to.zero.pseudo %v221
    %223 = vset.pattern.permute.xlu0 0
    %224 = vperm.xlu0 %223, %v222
    %v225 = vpop.permute.xlu0 %224
    %vm226 = vcmp.eq.s32.totalorder %v220, %v225
    %227 = vset.pattern.permute.xlu0 1
    %228 = vperm.xlu0 %227, %v222
    %v229 = vpop.permute.xlu0 %228
    %vm230 = vcmp.eq.s32.totalorder %v220, %v229
    %vm231 = vmor %vm226, %vm230
    %v232 = vsel %vm231, 1, 0
    %v233 = vcvt.s32.f32 %v232
    %v234 = vpack.c.bf16 %v233, %v233
    %v235 = vld [vmem:[%s2 + $0x80] sm:$0xf]
    %v236 = vld [vmem:[%s2 + $0x84] sm:$0xf]
    %v237 = vld [vmem:[%s2 + $0x88] sm:$0xf]
    %v238 = vld [vmem:[%s2 + $0x8c] sm:$0xf]
    %v239 = vld [vmem:[%s2 + $0x90] sm:$0xf]
    %v240 = vld [vmem:[%s2 + $0x94] sm:$0xf]
    %v241 = vld [vmem:[%s2 + $0x98] sm:$0xf]
    %v242 = vld [vmem:[%s2 + $0x9c] sm:$0xf]
    %v243 = vld [vmem:[%s2 + $0xa0] sm:$0xf]
    %v244 = vld [vmem:[%s2 + $0xa4] sm:$0xf]
    %v245 = vld [vmem:[%s2 + $0xa8] sm:$0xf]
    %v246 = vld [vmem:[%s2 + $0xac] sm:$0xf]
    %v247 = vld [vmem:[%s2 + $0xb0] sm:$0xf]
    %v248 = vld [vmem:[%s2 + $0xb4] sm:$0xf]
    %v249 = vld [vmem:[%s2 + $0xb8] sm:$0xf]
    %v250 = vld [vmem:[%s2 + $0xbc] sm:$0xf]
    %v251 = vpack.c.bf16 %v218, %v218
    %v252 = vld [vmem:[%s2 + $0xc0] sm:$0xf]
    %v253 = vld [vmem:[%s2 + $0xc4] sm:$0xf]
    %v254 = vld [vmem:[%s2 + $0xc8] sm:$0xf]
    %v255 = vld [vmem:[%s2 + $0xcc] sm:$0xf]
    %v256 = vld [vmem:[%s2 + $0xd0] sm:$0xf]
    %v257 = vld [vmem:[%s2 + $0xd4] sm:$0xf]
    %v258 = vld [vmem:[%s2 + $0xd8] sm:$0xf]
    %v259 = vld [vmem:[%s2 + $0xdc] sm:$0xf]
    %v260 = vld [vmem:[%s2 + $0xe0] sm:$0xf]
    %v261 = vld [vmem:[%s2 + $0xe4] sm:$0xf]
    %v262 = vld [vmem:[%s2 + $0xe8] sm:$0xf]
    %v263 = vld [vmem:[%s2 + $0xec] sm:$0xf]
    %v264 = vld [vmem:[%s2 + $0xf0] sm:$0xf]
    %v265 = vld [vmem:[%s2 + $0xf4] sm:$0xf]
    %v266 = vld [vmem:[%s2 + $0xf8] sm:$0xf]
    %v267 = vld [vmem:[%s2 + $0xfc] sm:$0xf]
    %v284 = vunpack.c.l.b16 %v252
    %v285 = vunpack.c.l.b16 %v253
    %v286 = vunpack.c.l.b16 %v254
    %v287 = vunpack.c.l.b16 %v255
    %v288 = vunpack.c.l.b16 %v256
    %v289 = vunpack.c.l.b16 %v257
    %v290 = vunpack.c.l.b16 %v258
    %v291 = vunpack.c.l.b16 %v259
    %v292 = vunpack.c.l.b16 %v260
    %v293 = vunpack.c.l.b16 %v261
    %v294 = vunpack.c.l.b16 %v262
    %v295 = vunpack.c.l.b16 %v263
    %v296 = vunpack.c.l.b16 %v264
    %v297 = vunpack.c.l.b16 %v265
    %v298 = vunpack.c.l.b16 %v266
    %v299 = vunpack.c.l.b16 %v267
    %v300 = vpack.c.b16 %v285, %v284
    %v301 = vpack.c.b16 %v287, %v286
    %v302 = vpack.c.b16 %v289, %v288
    %v303 = vpack.c.b16 %v291, %v290
    %v304 = vpack.c.b16 %v293, %v292
    %v305 = vpack.c.b16 %v295, %v294
    %v306 = vpack.c.b16 %v297, %v296
    %v307 = vpack.c.b16 %v299, %v298
    %316 = vmatprep.subr.bf16.mxu0 0
    %317 = vmatpush1.bf16.msra.mxu0 %v300
    %318 = vmatprep.subr.bf16.mxu0 0
    %319 = vmatpush1.bf16.msra.mxu0 %v301
    %320 = vmatprep.subr.bf16.mxu0 0
    %321 = vmatpush1.bf16.msra.mxu0 %v302
    %322 = vmatprep.subr.bf16.mxu0 0
    %323 = vmatpush1.bf16.msra.mxu0 %v303
    %324 = vmatprep.subr.bf16.mxu0 0
    %325 = vmatpush1.bf16.msra.mxu0 %v304
    %326 = vmatprep.subr.bf16.mxu0 0
    %327 = vmatpush1.bf16.msra.mxu0 %v305
    %328 = vmatprep.subr.bf16.mxu0 0
    %329 = vmatpush1.bf16.msra.mxu0 %v306
    %330 = vmatprep.subr.bf16.mxu0 0
    %331 = vmatpush1.bf16.msra.mxu0 %v307
    %332 = vmatprep.subr.bf16.mxu0 0
    %333 = vmatpush1.bf16.msra.mxu0 0
    %334 = vmatprep.subr.bf16.mxu0 0
    %335 = vmatpush1.bf16.msra.mxu0 0
    %336 = vmatprep.subr.bf16.mxu0 0
    %337 = vmatpush1.bf16.msra.mxu0 0
    %338 = vmatprep.subr.bf16.mxu0 0
    %339 = vmatpush1.bf16.msra.mxu0 0
    %340 = vmatprep.subr.bf16.mxu0 0
    %341 = vmatpush1.bf16.msra.mxu0 0
    %342 = vmatprep.subr.bf16.mxu0 0
    %343 = vmatpush1.bf16.msra.mxu0 0
    %344 = vmatprep.subr.bf16.mxu0 0
    %345 = vmatpush1.bf16.msra.mxu0 0
    %346 = vmatprep.subr.bf16.mxu0 0
    %347 = vmatpush1.bf16.msra.mxu0 0
    %348 = vmatprep.mubr.bf16.mxu0 0
    %349 = vmatmul.mubr.bf16.gmra.mrb[0].mxu0 %v251
    %v350 = vpop.f32.mrb[0].mxu0
    %v351 = vadd.f32 0.0, %v350
    %v352 = vpop.f32.mrb[0].mxu0
    %v353 = vpop.f32.mrb[0].mxu0
    %v354 = vpop.f32.mrb[0].mxu0
    %355 = vdwg.mxu0
    %v372 = vunpack.c.l.b16 %v235
    %v373 = vunpack.c.l.b16 %v236
    %v374 = vunpack.c.l.b16 %v237
    %v375 = vunpack.c.l.b16 %v238
    %v376 = vunpack.c.l.b16 %v239
    %v377 = vunpack.c.l.b16 %v240
    %v378 = vunpack.c.l.b16 %v241
    %v379 = vunpack.c.l.b16 %v242
    %v380 = vunpack.c.l.b16 %v243
    %v381 = vunpack.c.l.b16 %v244
    %v382 = vunpack.c.l.b16 %v245
    %v383 = vunpack.c.l.b16 %v246
    %v384 = vunpack.c.l.b16 %v247
    %v385 = vunpack.c.l.b16 %v248
    %v386 = vunpack.c.l.b16 %v249
    %v387 = vunpack.c.l.b16 %v250
    %v388 = vpack.c.b16 %v373, %v372
    %v389 = vpack.c.b16 %v375, %v374
    %v390 = vpack.c.b16 %v377, %v376
    %v391 = vpack.c.b16 %v379, %v378
    %v392 = vpack.c.b16 %v381, %v380
    %v393 = vpack.c.b16 %v383, %v382
    %v394 = vpack.c.b16 %v385, %v384
    %v395 = vpack.c.b16 %v387, %v386
    %404 = vmatprep.subr.bf16.mxu0 0
    %405 = vmatpush1.bf16.msra.mxu0 %v388
    %406 = vmatprep.subr.bf16.mxu0 0
    %407 = vmatpush1.bf16.msra.mxu0 %v389
    %408 = vmatprep.subr.bf16.mxu0 0
    %409 = vmatpush1.bf16.msra.mxu0 %v390
    %410 = vmatprep.subr.bf16.mxu0 0
    %411 = vmatpush1.bf16.msra.mxu0 %v391
    %412 = vmatprep.subr.bf16.mxu0 0
    %413 = vmatpush1.bf16.msra.mxu0 %v392
    %414 = vmatprep.subr.bf16.mxu0 0
    %415 = vmatpush1.bf16.msra.mxu0 %v393
    %416 = vmatprep.subr.bf16.mxu0 0
    %417 = vmatpush1.bf16.msra.mxu0 %v394
    %418 = vmatprep.subr.bf16.mxu0 0
    %419 = vmatpush1.bf16.msra.mxu0 %v395
    %420 = vmatprep.subr.bf16.mxu0 0
    %421 = vmatpush1.bf16.msra.mxu0 0
    %422 = vmatprep.subr.bf16.mxu0 0
    %423 = vmatpush1.bf16.msra.mxu0 0
    %424 = vmatprep.subr.bf16.mxu0 0
    %425 = vmatpush1.bf16.msra.mxu0 0
    %426 = vmatprep.subr.bf16.mxu0 0
    %427 = vmatpush1.bf16.msra.mxu0 0
    %428 = vmatprep.subr.bf16.mxu0 0
    %429 = vmatpush1.bf16.msra.mxu0 0
    %430 = vmatprep.subr.bf16.mxu0 0
    %431 = vmatpush1.bf16.msra.mxu0 0
    %432 = vmatprep.subr.bf16.mxu0 0
    %433 = vmatpush1.bf16.msra.mxu0 0
    %434 = vmatprep.subr.bf16.mxu0 0
    %435 = vmatpush1.bf16.msra.mxu0 0
    %436 = vmatprep.mubr.bf16.mxu0 0
    %437 = vmatmul.mubr.bf16.gmra.mrb[0].mxu0 %v234
    %v438 = vpop.f32.mrb[0].mxu0
    %v439 = vadd.f32 %v351, %v438
    %v440 = vpop.f32.mrb[0].mxu0
    %v441 = vpop.f32.mrb[0].mxu0
    %v442 = vpop.f32.mrb[0].mxu0
    %443 = vdwg.mxu0
    %445 = vset.pattern.permute.xlu0 2
    %446 = vperm.xlu0 %445, %v221
    %v447 = vpop.permute.xlu0 %446
    %v449 = vlaneseq
    %v450 = vshrl.u32 %v449, 7
    %v451 = vsub.s32 1, %v450
    %v452 = vrot.slane %v19, %v451
    %v453 = vmul.f32 %v447, %v452
    %v454 = vadd.f32 %v439, %v453
    %v455 = vlaneseq
    %v456 = vshrl.u32 %v455, 7
    %v457 = vsub.s32 2, %v456
    %v458 = vrot.slane %v19, %v457
    %v459 = vadd.f32 %v454, %v458
    %v460 = vmax.f32 %v459, 0.0
    %v461 = vpack.c.bf16 %v460, %v460
    %v462 = vld [vmem:[%s2 + $0x100] sm:$0xf]
    %v463 = vld [vmem:[%s2 + $0x104] sm:$0xf]
    %v464 = vld [vmem:[%s2 + $0x108] sm:$0xf]
    %v465 = vld [vmem:[%s2 + $0x10c] sm:$0xf]
    %v466 = vld [vmem:[%s2 + $0x110] sm:$0xf]
    %v467 = vld [vmem:[%s2 + $0x114] sm:$0xf]
    %v468 = vld [vmem:[%s2 + $0x118] sm:$0xf]
    %v469 = vld [vmem:[%s2 + $0x11c] sm:$0xf]
    %v470 = vld [vmem:[%s2 + $0x120] sm:$0xf]
    %v471 = vld [vmem:[%s2 + $0x124] sm:$0xf]
    %v472 = vld [vmem:[%s2 + $0x128] sm:$0xf]
    %v473 = vld [vmem:[%s2 + $0x12c] sm:$0xf]
    %v474 = vld [vmem:[%s2 + $0x130] sm:$0xf]
    %v475 = vld [vmem:[%s2 + $0x134] sm:$0xf]
    %v476 = vld [vmem:[%s2 + $0x138] sm:$0xf]
    %v477 = vld [vmem:[%s2 + $0x13c] sm:$0xf]
    %v478 = vlaneseq
    %v479 = vshrl.u32 %v478, 7
    %v480 = vsub.s32 3, %v479
    %v481 = vrot.slane %v19, %v480
    %v498 = vunpack.c.l.b16 %v462
    %v499 = vunpack.c.l.b16 %v463
    %v500 = vunpack.c.l.b16 %v464
    %v501 = vunpack.c.l.b16 %v465
    %v502 = vunpack.c.l.b16 %v466
    %v503 = vunpack.c.l.b16 %v467
    %v504 = vunpack.c.l.b16 %v468
    %v505 = vunpack.c.l.b16 %v469
    %v506 = vunpack.c.l.b16 %v470
    %v507 = vunpack.c.l.b16 %v471
    %v508 = vunpack.c.l.b16 %v472
    %v509 = vunpack.c.l.b16 %v473
    %v510 = vunpack.c.l.b16 %v474
    %v511 = vunpack.c.l.b16 %v475
    %v512 = vunpack.c.l.b16 %v476
    %v513 = vunpack.c.l.b16 %v477
    %v514 = vpack.c.b16 %v499, %v498
    %v515 = vpack.c.b16 %v501, %v500
    %v516 = vpack.c.b16 %v503, %v502
    %v517 = vpack.c.b16 %v505, %v504
    %v518 = vpack.c.b16 %v507, %v506
    %v519 = vpack.c.b16 %v509, %v508
    %v520 = vpack.c.b16 %v511, %v510
    %v521 = vpack.c.b16 %v513, %v512
    %530 = vmatprep.subr.bf16.mxu0 0
    %531 = vmatpush1.bf16.msra.mxu0 %v514
    %532 = vmatprep.subr.bf16.mxu0 0
    %533 = vmatpush1.bf16.msra.mxu0 %v515
    %534 = vmatprep.subr.bf16.mxu0 0
    %535 = vmatpush1.bf16.msra.mxu0 %v516
    %536 = vmatprep.subr.bf16.mxu0 0
    %537 = vmatpush1.bf16.msra.mxu0 %v517
    %538 = vmatprep.subr.bf16.mxu0 0
    %539 = vmatpush1.bf16.msra.mxu0 %v518
    %540 = vmatprep.subr.bf16.mxu0 0
    %541 = vmatpush1.bf16.msra.mxu0 %v519
    %542 = vmatprep.subr.bf16.mxu0 0
    %543 = vmatpush1.bf16.msra.mxu0 %v520
    %544 = vmatprep.subr.bf16.mxu0 0
    %545 = vmatpush1.bf16.msra.mxu0 %v521
    %546 = vmatprep.subr.bf16.mxu0 0
    %547 = vmatpush1.bf16.msra.mxu0 0
    %548 = vmatprep.subr.bf16.mxu0 0
    %549 = vmatpush1.bf16.msra.mxu0 0
    %550 = vmatprep.subr.bf16.mxu0 0
    %551 = vmatpush1.bf16.msra.mxu0 0
    %552 = vmatprep.subr.bf16.mxu0 0
    %553 = vmatpush1.bf16.msra.mxu0 0
    %554 = vmatprep.subr.bf16.mxu0 0
    %555 = vmatpush1.bf16.msra.mxu0 0
    %556 = vmatprep.subr.bf16.mxu0 0
    %557 = vmatpush1.bf16.msra.mxu0 0
    %558 = vmatprep.subr.bf16.mxu0 0
    %559 = vmatpush1.bf16.msra.mxu0 0
    %560 = vmatprep.subr.bf16.mxu0 0
    %561 = vmatpush1.bf16.msra.mxu0 0
    %562 = vmatprep.mubr.bf16.mxu0 0
    %563 = vmatmul.mubr.bf16.gmra.mrb[0].mxu0 %v461
    %v564 = vpop.f32.mrb[0].mxu0
    %v565 = vadd.f32 %v481, %v564
    %v566 = vpop.f32.mrb[0].mxu0
    %v567 = vpop.f32.mrb[0].mxu0
    %v568 = vpop.f32.mrb[0].mxu0
    %569 = vdwg.mxu0
    %v570 = vmax.f32 %v565, 0.0
    %v571 = vlaneseq
    %v572 = vshrl.u32 %v571, 7
    %v573 = vsub.s32 4, %v572
    %v574 = vrot.slane %v19, %v573
    %v575 = vmul.f32 %v570, %v574
    %v576 = vlaneseq
    %v577 = vshrl.u32 %v576, 7
    %v578 = vsub.s32 5, %v577
    %v579 = vrot.slane %v19, %v578
    %v580 = vadd.f32 %v575, %v579
    %v581 = vxor.u32 %v580, 2147483648
    %v582 = vmul.f32 %v581, 1.442695
    %v583 = vpow.pop %v582
    %v584 = vadd.f32 %v583, 1.0
    %v585 = vrcp.pop %v584
    %v586 = vmul.f32 1.0, %v585
    %v587 = vmul.f32 %v580, %v586
    %v588 = vpack.c.bf16 %v587, %v587
    %v589 = vld [vmem:[%s2 + $0x140] sm:$0xf]
    %v590 = vld [vmem:[%s2 + $0x144] sm:$0xf]
    %v591 = vld [vmem:[%s2 + $0x148] sm:$0xf]
    %v592 = vld [vmem:[%s2 + $0x14c] sm:$0xf]
    %v593 = vld [vmem:[%s2 + $0x150] sm:$0xf]
    %v594 = vld [vmem:[%s2 + $0x154] sm:$0xf]
    %v595 = vld [vmem:[%s2 + $0x158] sm:$0xf]
    %v596 = vld [vmem:[%s2 + $0x15c] sm:$0xf]
    %v597 = vld [vmem:[%s2 + $0x160] sm:$0xf]
    %v598 = vld [vmem:[%s2 + $0x164] sm:$0xf]
    %v599 = vld [vmem:[%s2 + $0x168] sm:$0xf]
    %v600 = vld [vmem:[%s2 + $0x16c] sm:$0xf]
    %v601 = vld [vmem:[%s2 + $0x170] sm:$0xf]
    %v602 = vld [vmem:[%s2 + $0x174] sm:$0xf]
    %v603 = vld [vmem:[%s2 + $0x178] sm:$0xf]
    %v604 = vld [vmem:[%s2 + $0x17c] sm:$0xf]
    %v605 = vlaneseq
    %v606 = vshrl.u32 %v605, 7
    %v607 = vsub.s32 6, %v606
    %v608 = vrot.slane %v19, %v607
    %v625 = vunpack.c.l.b16 %v589
    %v626 = vunpack.c.l.b16 %v590
    %v627 = vunpack.c.l.b16 %v591
    %v628 = vunpack.c.l.b16 %v592
    %v629 = vunpack.c.l.b16 %v593
    %v630 = vunpack.c.l.b16 %v594
    %v631 = vunpack.c.l.b16 %v595
    %v632 = vunpack.c.l.b16 %v596
    %v633 = vunpack.c.l.b16 %v597
    %v634 = vunpack.c.l.b16 %v598
    %v635 = vunpack.c.l.b16 %v599
    %v636 = vunpack.c.l.b16 %v600
    %v637 = vunpack.c.l.b16 %v601
    %v638 = vunpack.c.l.b16 %v602
    %v639 = vunpack.c.l.b16 %v603
    %v640 = vunpack.c.l.b16 %v604
    %v641 = vpack.c.b16 %v626, %v625
    %v642 = vpack.c.b16 %v628, %v627
    %v643 = vpack.c.b16 %v630, %v629
    %v644 = vpack.c.b16 %v632, %v631
    %v645 = vpack.c.b16 %v634, %v633
    %v646 = vpack.c.b16 %v636, %v635
    %v647 = vpack.c.b16 %v638, %v637
    %v648 = vpack.c.b16 %v640, %v639
    %657 = vmatprep.subr.bf16.mxu0 0
    %658 = vmatpush1.bf16.msra.mxu0 %v641
    %659 = vmatprep.subr.bf16.mxu0 0
    %660 = vmatpush1.bf16.msra.mxu0 %v642
    %661 = vmatprep.subr.bf16.mxu0 0
    %662 = vmatpush1.bf16.msra.mxu0 %v643
    %663 = vmatprep.subr.bf16.mxu0 0
    %664 = vmatpush1.bf16.msra.mxu0 %v644
    %665 = vmatprep.subr.bf16.mxu0 0
    %666 = vmatpush1.bf16.msra.mxu0 %v645
    %667 = vmatprep.subr.bf16.mxu0 0
    %668 = vmatpush1.bf16.msra.mxu0 %v646
    %669 = vmatprep.subr.bf16.mxu0 0
    %670 = vmatpush1.bf16.msra.mxu0 %v647
    %671 = vmatprep.subr.bf16.mxu0 0
    %672 = vmatpush1.bf16.msra.mxu0 %v648
    %673 = vmatprep.subr.bf16.mxu0 0
    %674 = vmatpush1.bf16.msra.mxu0 0
    %675 = vmatprep.subr.bf16.mxu0 0
    %676 = vmatpush1.bf16.msra.mxu0 0
    %677 = vmatprep.subr.bf16.mxu0 0
    %678 = vmatpush1.bf16.msra.mxu0 0
    %679 = vmatprep.subr.bf16.mxu0 0
    %680 = vmatpush1.bf16.msra.mxu0 0
    %681 = vmatprep.subr.bf16.mxu0 0
    %682 = vmatpush1.bf16.msra.mxu0 0
    %683 = vmatprep.subr.bf16.mxu0 0
    %684 = vmatpush1.bf16.msra.mxu0 0
    %685 = vmatprep.subr.bf16.mxu0 0
    %686 = vmatpush1.bf16.msra.mxu0 0
    %687 = vmatprep.subr.bf16.mxu0 0
    %688 = vmatpush1.bf16.msra.mxu0 0
    %689 = vmatprep.mubr.bf16.mxu0 0
    %690 = vmatmul.mubr.bf16.gmra.mrb[0].mxu0 %v588
    %v691 = vpop.f32.mrb[0].mxu0
    %v692 = vadd.f32 %v608, %v691
    %v693 = vpop.f32.mrb[0].mxu0
    %v694 = vpop.f32.mrb[0].mxu0
    %v695 = vpop.f32.mrb[0].mxu0
    %696 = vdwg.mxu0
    %697 = vst [vmem:[#allocation2] sm:$0x3] %v692
    // Predicated region
    $region18: #{forward.1} parent=1 // pred_check
      _
    $region19: #{forward.1} parent=1 // pred_check_branch
      %699 = sbr.rel (0) target = $region21
    $region20: #{forward.1} parent=1 // pred_region
      %s701 = ssub.s32 32, 32
      %702 = vsyncadd [#allocation3], %s701
      %s704 = sshll.u32 [#allocation2], 4
      %s705 = int_to_ptr.vmem [resolvable:$true] %s704
      %707 = dma.vmem_to_hbm [thread:$0]  %s705, 32, %s4, [#allocation3]
    $region21: #{forward.1} parent=1 // pred_fallthru
      _
    // Predicated region
    $region22: #{forward.1} parent=1 // pred_check
      _
    $region23: #{forward.1} parent=1 // pred_check_branch
      %709 = sbr.rel (0) target = $region25
    $region24: #{forward.1} parent=1 // pred_region
      %710 = dma.done [#allocation3], 32
    $region25: #{forward.1} parent=1 // pred_fallthru
      _
    %711 = vsyncpa [#allocation3], 1

</llo_original>
